<compile_context>
chip_gen: v6e
topology: v6e:2x2x1
jax: 0.10.0
libtpu: 0.0.40
codegen_flags: <defaults>
</compile_context>

<pallas_src>
import functools

import jax
import jax.numpy as jnp
from jax.experimental import pallas as pl
from jax.experimental.pallas import tpu as pltpu

# Class-balance weights from the PyTorch module (C = 7 classes).
BALANCE_WEIGHT = (0.95124031, 4.36690391, 1.71143654, 0.25714585,
                  0.6191221, 1.74056738, 0.48617274)
NUM_CLASSES = len(BALANCE_WEIGHT)   # 7
C_PAD = 8                            # pad class axis to one sublane group
MAX_TILE_N = 32768                   # lanes per grid step (multiple of 128)
NEG_INF = -1e30                      # keep finite: 0 * (-1e30) == 0, no NaN


def _cdiv(a, b):
    return -(-a // b)


def _round_up(a, b):
    return _cdiv(a, b) * b


def _num_tensorcores():
    """2 only on multi-TensorCore (v7x-style) chips; 1 elsewhere."""
    try:
        kind = jax.devices()[0].device_kind.lower()
    except Exception:
        return 1
    return 2 if ("v7" in kind or "tpu7" in kind) else 1


def _lsr2_kernel(x_ref, t_ref, out_ref, acc_ref, *, b_coef, w_sum):
    i = pl.program_id(1)

    @pl.when(i == 0)
    def _():
        acc_ref[...] = jnp.zeros_like(acc_ref)

    x = x_ref[...]                      # (C_PAD, tile_n) f32; row 7 = -1e30 pad class
    t = t_ref[...]                      # (1, tile_n) i32; padded columns hold 7
    c_pad, tile_n = x.shape

    # Numerically stable log-sum-exp over the class (sublane) axis.
    m = jnp.max(x, axis=0, keepdims=True)                        # (1, tile_n)
    z = x - m                                                    # (8, tile_n)
    lse = jnp.log(jnp.sum(jnp.exp(z), axis=0, keepdims=True))    # (1, tile_n)

    # z at the target class (one-hot select + sublane reduce).
    cls = jax.lax.broadcasted_iota(jnp.int32, (c_pad, tile_n), 0)
    z_t = jnp.sum(jnp.where(cls == t, z, 0.0), axis=0, keepdims=True)

    # sum_j w_j * z_j.  Per-sublane weight column built from scalar literals
    # (pad row keeps weight 0) so no array constant is captured.
    row = jax.lax.broadcasted_iota(jnp.int32, (c_pad, 1), 0)
    w_col = jnp.zeros((c_pad, 1), jnp.float32)
    for j, wj in enumerate(BALANCE_WEIGHT):
        w_col = jnp.where(row == j, wj, w_col)
    wz = jnp.sum(w_col * z, axis=0, keepdims=True)               # (1, tile_n)

    # Per-column coefficients: b[t] = e/(W - w_t), a[t] = 1 - W*b[t]
    # (identity a[t] + W*b[t] == 1).  Padded columns (t == 7) get a = b = 0,
    # so their loss is exactly zero and no lane mask is needed.
    b_t = jnp.zeros(t.shape, jnp.float32)
    for j, bj in enumerate(b_coef):
        b_t = jnp.where(t == j, bj, b_t)
    a_t = (t < NUM_CLASSES).astype(jnp.float32) - w_sum * b_t

    # loss_i = a[t]*(-logp_t) + b[t]*sum_j w_j*(-logp_j)
    #        = a[t]*(lse - z_t) + b[t]*(W*lse - wz)
    acc_ref[...] += a_t * (lse - z_t) + b_t * (w_sum * lse - wz)

    @pl.when(i == pl.num_programs(1) - 1)
    def _():
        out_ref[...] = jnp.full(out_ref.shape, jnp.sum(acc_ref[...]),
                                dtype=jnp.float32)


@functools.partial(jax.jit, static_argnames=("e",))
def lsr2_loss(x, target, e):
    """x: [N, 7] float logits, target: [N] int labels. Returns scalar f32."""
    n, c = x.shape
    assert c == NUM_CLASSES, "LSR2 balance weights fix the class count to 7"
    e = float(e)

    w_sum = float(sum(BALANCE_WEIGHT))
    b_coef = tuple(e / (w_sum - w) for w in BALANCE_WEIGHT)

    num_cores = _num_tensorcores()
    tile_n = min(MAX_TILE_N, _round_up(max(1, _cdiv(n, num_cores)), 128))
    tiles_per_core = _cdiv(n, num_cores * tile_n)
    n_pad = num_cores * tiles_per_core * tile_n

    # Lane-dense layout: classes on sublanes (padded to 8 with -1e30 logits /
    # zero weight), batch on lanes.  Fused transpose+pad (one HBM pass); padded
    # batch columns get the pad label (7), so the kernel needs no lane mask.
    xt = jnp.pad(x.astype(jnp.float32).T,
                 ((0, C_PAD - c), (0, n_pad - n)),
                 constant_values=NEG_INF)
    tt = jnp.pad(target.astype(jnp.int32).reshape(1, n),
                 ((0, 0), (0, n_pad - n)),
                 constant_values=NUM_CLASSES)

    kernel = functools.partial(_lsr2_kernel, b_coef=b_coef, w_sum=w_sum)

    partials = pl.pallas_call(
        kernel,
        out_shape=jax.ShapeDtypeStruct((num_cores, 1, 128), jnp.float32),
        grid_spec=pltpu.PrefetchScalarGridSpec(
            num_scalar_prefetch=0,
            grid=(num_cores, tiles_per_core),
            in_specs=[
                pl.BlockSpec((C_PAD, tile_n),
                             lambda cc, ii: (0, cc * tiles_per_core + ii)),
                pl.BlockSpec((1, tile_n),
                             lambda cc, ii: (0, cc * tiles_per_core + ii)),
            ],
            out_specs=pl.BlockSpec((1, 1, 128), lambda cc, ii: (cc, 0, 0)),
            scratch_shapes=[pltpu.VMEM((1, tile_n), jnp.float32)],
        ),
        # Note: on v7x, verify the leading axis actually splits across the two
        # TensorCores (switch to pltpu.CORE_PARALLEL if it does not).
        compiler_params=pltpu.CompilerParams(
            dimension_semantics=("parallel", "arbitrary")),
    )(xt, tt)

    # Per-core partial sums -> global mean over the true batch size.
    return jnp.sum(partials[:, 0, 0]) / jnp.float32(n)


def _lsr2_reference(x, target, e):
    """Pure-JAX reference mirroring the PyTorch forward."""
    c = x.shape[1]
    w = jnp.asarray(BALANCE_WEIGHT, dtype=jnp.float32)
    one_hot = jax.nn.one_hot(target, c, dtype=jnp.float32)
    other_w = jnp.where(one_hot > 0, 0.0, w[None, :])
    denom = jnp.sum(other_w, axis=1, keepdims=True)
    smoothed = jnp.where(one_hot > 0, 1.0 - e, e * other_w / denom)
    logp = jax.nn.log_softmax(x, axis=1)
    return jnp.mean(jnp.sum(-logp * smoothed, axis=1))


if __name__ == "__main__":
    key = jax.random.PRNGKey(0)
    kx, kt = jax.random.split(key)

    N, C = 64, 7          # C = 7 is fixed by the balance-weight vector in LSR2
    e = 0.1

    x = jax.random.normal(kx, (N, C), dtype=jnp.float32)
    target = jax.random.randint(kt, (N,), 0, C, dtype=jnp.int32)

    loss = lsr2_loss(x, target, e)
    jax.block_until_ready(loss)

    ref = _lsr2_reference(x, target, e)
    assert jnp.allclose(loss, ref, rtol=1e-4, atol=1e-4), (loss, ref)

    print("KERNEL_OK")
</pallas_src>

<mosaic_0001>
module attributes {stable_mosaic.version = 11 : i64} {
  func.func @_lsr2_kernel(%arg0: i32, %arg1: i32, %arg2: memref<8x128xf32, #tpu.memory_space<vmem>>, %arg3: memref<1x128xi32, #tpu.memory_space<vmem>>, %arg4: memref<1x1x128xf32, #tpu.memory_space<vmem>>, %arg5: memref<1x128xf32, #tpu.memory_space<vmem>>) attributes {dimension_semantics = [#tpu.dimension_semantics<parallel>, #tpu.dimension_semantics<arbitrary>], iteration_bounds = array<i64: 1, 1>, scalar_prefetch = 0 : i64, scratch_operands = 1 : i64, tpu.core_type = #tpu.core_type<tc>, window_params = [{transform_indices = @transform_0, window_bounds = array<i64: 8, 128>}, {transform_indices = @transform_1, window_bounds = array<i64: 1, 128>}, {transform_indices = @transform_2, window_bounds = array<i64: 1, 1, 128>}]} {
    %c0_i32 = arith.constant 0 : i32
    %0 = arith.cmpi eq, %arg1, %c0_i32 : i32
    %1 = arith.extui %0 : i1 to i32
    %c0_i32_0 = arith.constant 0 : i32
    %2 = arith.cmpi ne, %1, %c0_i32_0 : i32
    scf.if %2 {
      %cst_40 = arith.constant 0.000000e+00 : f32
      %103 = vector.broadcast %cst_40 : f32 to vector<1x128xf32>
      %c0_41 = arith.constant 0 : index
      %c0_42 = arith.constant 0 : index
      %104 = vector.load %arg5[%c0_41, %c0_42] : memref<1x128xf32, #tpu.memory_space<vmem>>, vector<1x128xf32>
      tpu.vector_store %arg5[%c0_41, %c0_42], %103 {strides = array<i32>} : memref<1x128xf32, #tpu.memory_space<vmem>>, vector<1x128xf32>,
    } else {
    }
    %c0 = arith.constant 0 : index
    %c0_1 = arith.constant 0 : index
    %3 = vector.load %arg2[%c0, %c0_1] : memref<8x128xf32, #tpu.memory_space<vmem>>, vector<8x128xf32>
    %c0_2 = arith.constant 0 : index
    %c0_3 = arith.constant 0 : index
    %4 = vector.load %arg3[%c0_2, %c0_3] : memref<1x128xi32, #tpu.memory_space<vmem>>, vector<1x128xi32>
    %cst = arith.constant dense<0xFF800000> : vector<128xf32>
    %5 = vector.multi_reduction <maximumf>, %3, %cst [0] : vector<8x128xf32> to vector<128xf32>
    %6 = vector.shape_cast %5 : vector<128xf32> to vector<1x128xf32>
    %7 = vector.broadcast %6 : vector<1x128xf32> to vector<8x128xf32>
    %8 = arith.subf %3, %7 : vector<8x128xf32>
    %9 = math.exp %8 : vector<8x128xf32>
    %cst_4 = arith.constant dense<0.000000e+00> : vector<128xf32>
    %10 = vector.multi_reduction <add>, %9, %cst_4 [0] : vector<8x128xf32> to vector<128xf32>
    %11 = vector.shape_cast %10 : vector<128xf32> to vector<1x128xf32>
    %12 = math.log %11 : vector<1x128xf32>
    %13 = tpu.iota {dimensions = array<i32: 0>} : vector<8x128xi32>
    %14 = vector.broadcast %4 : vector<1x128xi32> to vector<8x128xi32>
    %15 = arith.cmpi eq, %13, %14 : vector<8x128xi32>
    %cst_5 = arith.constant 0.000000e+00 : f32
    %16 = vector.broadcast %cst_5 : f32 to vector<8x128xf32>
    %17 = arith.select %15, %8, %16 : vector<8x128xi1>, vector<8x128xf32>
    %cst_6 = arith.constant dense<0.000000e+00> : vector<128xf32>
    %18 = vector.multi_reduction <add>, %17, %cst_6 [0] : vector<8x128xf32> to vector<128xf32>
    %19 = vector.shape_cast %18 : vector<128xf32> to vector<1x128xf32>
    %20 = tpu.iota {dimensions = array<i32: 0>} : vector<8x1xi32>
    %cst_7 = arith.constant 0.000000e+00 : f32
    %21 = vector.broadcast %cst_7 : f32 to vector<8x1xf32>
    %c0_i32_8 = arith.constant 0 : i32
    %22 = vector.broadcast %c0_i32_8 : i32 to vector<8x1xi32>
    %23 = arith.cmpi eq, %20, %22 : vector<8x1xi32>
    %cst_9 = arith.constant 0.951240301 : f32
    %24 = vector.broadcast %cst_9 : f32 to vector<8x1xf32>
    %25 = arith.select %23, %24, %21 : vector<8x1xi1>, vector<8x1xf32>
    %c1_i32 = arith.constant 1 : i32
    %26 = vector.broadcast %c1_i32 : i32 to vector<8x1xi32>
    %27 = arith.cmpi eq, %20, %26 : vector<8x1xi32>
    %cst_10 = arith.constant 4.36690378 : f32
    %28 = vector.broadcast %cst_10 : f32 to vector<8x1xf32>
    %29 = arith.select %27, %28, %25 : vector<8x1xi1>, vector<8x1xf32>
    %c2_i32 = arith.constant 2 : i32
    %30 = vector.broadcast %c2_i32 : i32 to vector<8x1xi32>
    %31 = arith.cmpi eq, %20, %30 : vector<8x1xi32>
    %cst_11 = arith.constant 1.71143651 : f32
    %32 = vector.broadcast %cst_11 : f32 to vector<8x1xf32>
    %33 = arith.select %31, %32, %29 : vector<8x1xi1>, vector<8x1xf32>
    %c3_i32 = arith.constant 3 : i32
    %34 = vector.broadcast %c3_i32 : i32 to vector<8x1xi32>
    %35 = arith.cmpi eq, %20, %34 : vector<8x1xi32>
    %cst_12 = arith.constant 0.257145852 : f32
    %36 = vector.broadcast %cst_12 : f32 to vector<8x1xf32>
    %37 = arith.select %35, %36, %33 : vector<8x1xi1>, vector<8x1xf32>
    %c4_i32 = arith.constant 4 : i32
    %38 = vector.broadcast %c4_i32 : i32 to vector<8x1xi32>
    %39 = arith.cmpi eq, %20, %38 : vector<8x1xi32>
    %cst_13 = arith.constant 0.619122087 : f32
    %40 = vector.broadcast %cst_13 : f32 to vector<8x1xf32>
    %41 = arith.select %39, %40, %37 : vector<8x1xi1>, vector<8x1xf32>
    %c5_i32 = arith.constant 5 : i32
    %42 = vector.broadcast %c5_i32 : i32 to vector<8x1xi32>
    %43 = arith.cmpi eq, %20, %42 : vector<8x1xi32>
    %cst_14 = arith.constant 1.74056733 : f32
    %44 = vector.broadcast %cst_14 : f32 to vector<8x1xf32>
    %45 = arith.select %43, %44, %41 : vector<8x1xi1>, vector<8x1xf32>
    %c6_i32 = arith.constant 6 : i32
    %46 = vector.broadcast %c6_i32 : i32 to vector<8x1xi32>
    %47 = arith.cmpi eq, %20, %46 : vector<8x1xi32>
    %cst_15 = arith.constant 0.486172736 : f32
    %48 = vector.broadcast %cst_15 : f32 to vector<8x1xf32>
    %49 = arith.select %47, %48, %45 : vector<8x1xi1>, vector<8x1xf32>
    %50 = vector.broadcast %49 : vector<8x1xf32> to vector<8x128xf32>
    %51 = arith.mulf %50, %8 : vector<8x128xf32>
    %cst_16 = arith.constant dense<0.000000e+00> : vector<128xf32>
    %52 = vector.multi_reduction <add>, %51, %cst_16 [0] : vector<8x128xf32> to vector<128xf32>
    %53 = vector.shape_cast %52 : vector<128xf32> to vector<1x128xf32>
    %cst_17 = arith.constant 0.000000e+00 : f32
    %54 = vector.broadcast %cst_17 : f32 to vector<1x128xf32>
    %c0_i32_18 = arith.constant 0 : i32
    %55 = vector.broadcast %c0_i32_18 : i32 to vector<1x128xi32>
    %56 = arith.cmpi eq, %4, %55 : vector<1x128xi32>
    %cst_19 = arith.constant 0.0108916461 : f32
    %57 = vector.broadcast %cst_19 : f32 to vector<1x128xf32>
    %58 = arith.select %56, %57, %54 : vector<1x128xi1>, vector<1x128xf32>
    %c1_i32_20 = arith.constant 1 : i32
    %59 = vector.broadcast %c1_i32_20 : i32 to vector<1x128xi32>
    %60 = arith.cmpi eq, %4, %59 : vector<1x128xi32>
    %cst_21 = arith.constant 0.0173439924 : f32
    %61 = vector.broadcast %cst_21 : f32 to vector<1x128xf32>
    %62 = arith.select %60, %61, %58 : vector<1x128xi1>, vector<1x128xf32>
    %c2_i32_22 = arith.constant 2 : i32
    %63 = vector.broadcast %c2_i32_22 : i32 to vector<1x128xi32>
    %64 = arith.cmpi eq, %4, %63 : vector<1x128xi32>
    %cst_23 = arith.constant 0.0118748592 : f32
    %65 = vector.broadcast %cst_23 : f32 to vector<1x128xf32>
    %66 = arith.select %64, %65, %62 : vector<1x128xi1>, vector<1x128xf32>
    %c3_i32_24 = arith.constant 3 : i32
    %67 = vector.broadcast %c3_i32_24 : i32 to vector<1x128xi32>
    %68 = arith.cmpi eq, %4, %67 : vector<1x128xi32>
    %cst_25 = arith.constant 0.0101261279 : f32
    %69 = vector.broadcast %cst_25 : f32 to vector<1x128xf32>
    %70 = arith.select %68, %69, %66 : vector<1x128xi1>, vector<1x128xf32>
    %c4_i32_26 = arith.constant 4 : i32
    %71 = vector.broadcast %c4_i32_26 : i32 to vector<1x128xi32>
    %72 = arith.cmpi eq, %4, %71 : vector<1x128xi32>
    %cst_27 = arith.constant 0.0105114151 : f32
    %73 = vector.broadcast %cst_27 : f32 to vector<1x128xf32>
    %74 = arith.select %72, %73, %70 : vector<1x128xi1>, vector<1x128xf32>
    %c5_i32_28 = arith.constant 5 : i32
    %75 = vector.broadcast %c5_i32_28 : i32 to vector<1x128xi32>
    %76 = arith.cmpi eq, %4, %75 : vector<1x128xi32>
    %cst_29 = arith.constant 0.0119160805 : f32
    %77 = vector.broadcast %cst_29 : f32 to vector<1x128xf32>
    %78 = arith.select %76, %77, %74 : vector<1x128xi1>, vector<1x128xf32>
    %c6_i32_30 = arith.constant 6 : i32
    %79 = vector.broadcast %c6_i32_30 : i32 to vector<1x128xi32>
    %80 = arith.cmpi eq, %4, %79 : vector<1x128xi32>
    %cst_31 = arith.constant 0.0103665441 : f32
    %81 = vector.broadcast %cst_31 : f32 to vector<1x128xf32>
    %82 = arith.select %80, %81, %78 : vector<1x128xi1>, vector<1x128xf32>
    %c7_i32 = arith.constant 7 : i32
    %83 = vector.broadcast %c7_i32 : i32 to vector<1x128xi32>
    %84 = arith.cmpi slt, %4, %83 : vector<1x128xi32>
    %85 = arith.extui %84 : vector<1x128xi1> to vector<1x128xi32>
    %86 = arith.sitofp %85 : vector<1x128xi32> to vector<1x128xf32>
    %cst_32 = arith.constant 10.1325884 : f32
    %87 = vector.broadcast %cst_32 : f32 to vector<1x128xf32>
    %88 = arith.mulf %87, %82 : vector<1x128xf32>
    %89 = arith.subf %86, %88 : vector<1x128xf32>
    %c0_33 = arith.constant 0 : index
    %c0_34 = arith.constant 0 : index
    %90 = vector.load %arg5[%c0_33, %c0_34] : memref<1x128xf32, #tpu.memory_space<vmem>>, vector<1x128xf32>
    %91 = arith.subf %12, %19 : vector<1x128xf32>
    %92 = arith.mulf %89, %91 : vector<1x128xf32>
    %cst_35 = arith.constant 10.1325884 : f32
    %93 = vector.broadcast %cst_35 : f32 to vector<1x128xf32>
    %94 = arith.mulf %93, %12 : vector<1x128xf32>
    %95 = arith.subf %94, %53 : vector<1x128xf32>
    %96 = arith.mulf %82, %95 : vector<1x128xf32>
    %97 = arith.addf %92, %96 : vector<1x128xf32>
    %98 = arith.addf %90, %97 : vector<1x128xf32>
    %c0_36 = arith.constant 0 : index
    %c0_37 = arith.constant 0 : index
    %99 = vector.load %arg5[%c0_36, %c0_37] : memref<1x128xf32, #tpu.memory_space<vmem>>, vector<1x128xf32>
    tpu.vector_store %arg5[%c0_36, %c0_37], %98 {strides = array<i32>} : memref<1x128xf32, #tpu.memory_space<vmem>>, vector<1x128xf32>,
    %c0_i32_38 = arith.constant 0 : i32
    %100 = arith.cmpi eq, %arg1, %c0_i32_38 : i32
    %101 = arith.extui %100 : i1 to i32
    %c0_i32_39 = arith.constant 0 : i32
    %102 = arith.cmpi ne, %101, %c0_i32_39 : i32
    scf.if %102 {
      %c0_40 = arith.constant 0 : index
      %c0_41 = arith.constant 0 : index
      %103 = vector.load %arg5[%c0_40, %c0_41] : memref<1x128xf32, #tpu.memory_space<vmem>>, vector<1x128xf32>
      %104 = vector.shape_cast %103 : vector<1x128xf32> to vector<1x1x128xf32>
      %cst_42 = arith.constant dense<0.000000e+00> : vector<1xf32>
      %105 = vector.multi_reduction <add>, %104, %cst_42 [1, 2] : vector<1x1x128xf32> to vector<1xf32>
      %106 = vector.shape_cast %105 : vector<1xf32> to vector<1x1x1xf32>
      %107 = vector.extract %106[0, 0, 0] : f32 from vector<1x1x1xf32>
      %108 = vector.broadcast %107 : f32 to vector<1x1x128xf32>
      %c0_43 = arith.constant 0 : index
      %c0_44 = arith.constant 0 : index
      %c0_45 = arith.constant 0 : index
      %109 = vector.load %arg4[%c0_43, %c0_44, %c0_45] : memref<1x1x128xf32, #tpu.memory_space<vmem>>, vector<1x1x128xf32>
      tpu.vector_store %arg4[%c0_43, %c0_44, %c0_45], %108 {strides = array<i32>} : memref<1x1x128xf32, #tpu.memory_space<vmem>>, vector<1x1x128xf32>,
    } else {
    }
    return
  }
  func.func @transform_0(%arg0: i32, %arg1: i32) -> (i32, i32) {
    %c1_i32 = arith.constant 1 : i32
    %0 = arith.muli %arg0, %c1_i32 : i32
    %1 = arith.addi %0, %arg1 : i32
    %c0_i32 = arith.constant 0 : i32
    %c0_i32_0 = arith.constant 0 : i32
    return %c0_i32, %1 : i32, i32
  }
  func.func @transform_1(%arg0: i32, %arg1: i32) -> (i32, i32) {
    %c1_i32 = arith.constant 1 : i32
    %0 = arith.muli %arg0, %c1_i32 : i32
    %1 = arith.addi %0, %arg1 : i32
    %c0_i32 = arith.constant 0 : i32
    %c0_i32_0 = arith.constant 0 : i32
    return %c0_i32, %1 : i32, i32
  }
  func.func @transform_2(%arg0: i32, %arg1: i32) -> (i32, i32, i32) {
    %c0_i32 = arith.constant 0 : i32
    %c0_i32_0 = arith.constant 0 : i32
    %c0_i32_1 = arith.constant 0 : i32
    return %arg0, %c0_i32, %c0_i32_0 : i32, i32, i32
  }
}

</mosaic_0001>

<llo_original>
// kernel: lsr2_loss.1
$region0: #{lsr2_loss.1}
  #allocation0 [shape = 'u32[]', space=smem, size = 0x4, offset = 0x4, fixed_abs, tag = 'smem constant byte address 0x4 - core index']
  #allocation1 [shape = 'u32[144,128]{1,0:T(1,128)}', space=vmem, size = 0x12000, scoped, tag = 'internal scratch']
  #allocation2 [shape = 'f32[1,128]{1,0:T(1,128)}', space=vmem, size = 0x200, scoped, tag = 'scratch operand']
  %s0 = inlined_call_operand.vmem [shape: f32[8,128], index: 0, kind: input, shape index: {}]
  %s1 = inlined_call_operand.vmem [shape: s32[1,128], index: 1, kind: input, shape index: {}]
  %s2 = inlined_call_operand.vmem [shape: f32[1,1,128], index: 2, kind: output, shape index: {}]
  %s3 = sld [smem:[#allocation0]]
  $region26: #{lsr2_loss.1} parent=0
    _
  %s5 = ssub.s32 1, %s3
  %s6 = scalar_select 0, %s5, %s3
  // Predicated region
  $region2: #{lsr2_loss.1} parent=0 // pred_check
    _
  $region3: #{lsr2_loss.1} parent=0 // pred_check_branch
    %8 = sbr.rel (0) target = $region5
  $region4: #{lsr2_loss.1} parent=0 // pred_region
    %s9 = sadd.s32 0, 0
    %p10 = scmp.lt.s32.totalorder %s9, 0
    %s11 = scalar_select %p10, %s9, 0
    %s12 = smul.addr %s11, 8
    %s13 = scalar_lea.vmem %s0, %s12
    %s14 = sadd.s32 0, 0
  $region5: #{lsr2_loss.1} parent=0 // pred_fallthru
    _
  // Predicated region
  $region6: #{lsr2_loss.1} parent=0 // pred_check
    _
  $region7: #{lsr2_loss.1} parent=0 // pred_check_branch
    %16 = sbr.rel (0) target = $region9
  $region8: #{lsr2_loss.1} parent=0 // pred_region
    %s17 = sadd.s32 0, 0
    %p18 = scmp.lt.s32.totalorder %s17, 0
    %s19 = scalar_select %p18, %s17, 0
    %s20 = scalar_lea.vmem %s1, %s19
    %s21 = sadd.s32 0, 0
  $region9: #{lsr2_loss.1} parent=0 // pred_fallthru
    _
  %s22 = sadd.s32 0, 0
  %p23 = scmp.lt.s32.totalorder %s22, 0
  %s24 = scalar_select %p23, %s22, 0
  %s25 = smul.addr %s24, 8
  %s26 = scalar_lea.vmem %s0, %s25
  %s27 = sadd.s32 0, 0
  %p28 = scmp.lt.s32.totalorder %s27, 0
  %s29 = scalar_select %p28, %s27, 0
  %s30 = scalar_lea.vmem %s1, %s29
  %s31 = sadd.s32 0, 0
  %p32 = scmp.lt.s32.totalorder %s31, 0
  %s33 = scalar_select %p32, %s31, 0
  %s34 = smul.addr %s33, 8
  %s35 = scalar_lea.vmem %s0, %s34
  %s36 = sadd.s32 0, 0
  %s37 = sadd.s32 0, 0
  %p38 = scmp.lt.s32.totalorder %s37, 0
  %s39 = scalar_select %p38, %s37, 0
  %s40 = scalar_lea.vmem %s1, %s39
  %s41 = sadd.s32 0, 0
  %p42 = scmp.eq.s32.totalorder 0, 0
  // Predicated region
  $region10: #{lsr2_loss.1} parent=0 // pred_check
    %p43 = pneg %p42
  $region11: #{lsr2_loss.1} parent=0 // pred_check_branch
    %45 = sbr.rel (%p43) target = $region13
  $region12: #{lsr2_loss.1} parent=0 // pred_region
    %46 = vst [vmem:[#allocation2] sm:$0x1] 0.0
  $region13: #{lsr2_loss.1} parent=0 // pred_fallthru
    _
  %v47 = vld [vmem:[%s35] sm:$0xff]
  %v48 = vld [vmem:[%s40] sm:$0x1]
  %v49 = vrot.slane %v47, 4
  %v50 = vmax.f32 %v47, %v49
  %v51 = vrot.slane %v50, 2
  %v52 = vmax.f32 %v50, %v51
  %v53 = vrot.slane %v52, 1
  %v54 = vmax.f32 %v52, %v53
  %v55 = vsub.f32 %v47, %v54
  %v56 = vmul.f32 %v55, 1.442695
  %v57 = vpow.pop %v56
  %v58 = vrot.slane %v57, 4
  %v59 = vadd.f32 %v57, %v58
  %v60 = vrot.slane %v59, 2
  %v61 = vadd.f32 %v59, %v60
  %v62 = vrot.slane %v61, 1
  %v63 = vadd.f32 %v61, %v62
  %v64 = vlog2.pop %v63
  %v65 = vmul.f32 %v64, 0.6931472
  %v66 = vlaneseq
  %v67 = vshrl.u32 %v66, 7
  %v68 = vlaneseq
  %v69 = vshrl.u32 %v68, 7
  %v70 = vsub.s32 0, %v69
  %v71 = vrot.slane %v48, %v70
  %vm72 = vcmp.eq.s32.totalorder %v67, %v71
  %v73 = vsel %vm72, %v55, 0.0
  %v74 = vrot.slane %v73, 4
  %v75 = vadd.f32 %v73, %v74
  %v76 = vrot.slane %v75, 2
  %v77 = vadd.f32 %v75, %v76
  %v78 = vrot.slane %v77, 1
  %v79 = vadd.f32 %v77, %v78
  %vm80 = vcmp.eq.s32.totalorder %v67, 0
  %v81 = vsel %vm80, 0.9512403, 0.0
  %vm82 = vcmp.eq.s32.totalorder %v67, 1
  %v83 = vsel %vm82, 4.366904, %v81
  %vm84 = vcmp.eq.s32.totalorder %v67, 2
  %v85 = vsel %vm84, 1.7114365, %v83
  %vm86 = vcmp.eq.s32.totalorder %v67, 3
  %v87 = vsel %vm86, 0.25714585, %v85
  %vm88 = vcmp.eq.s32.totalorder %v67, 4
  %v89 = vsel %vm88, 0.6191221, %v87
  %vm90 = vcmp.eq.s32.totalorder %v67, 5
  %v91 = vsel %vm90, 1.7405673, %v89
  %vm92 = vcmp.eq.s32.totalorder %v67, 6
  %v93 = vsel %vm92, 0.48617274, %v91
  %v94 = vmul.f32 %v93, %v55
  %v95 = vrot.slane %v94, 4
  %v96 = vadd.f32 %v94, %v95
  %v97 = vrot.slane %v96, 2
  %v98 = vadd.f32 %v96, %v97
  %v99 = vrot.slane %v98, 1
  %v100 = vadd.f32 %v98, %v99
  %vm101 = vcmp.eq.s32.totalorder %v48, 0
  %v102 = vsel %vm101, 0.010891646, 0.0
  %vm103 = vcmp.eq.s32.totalorder %v48, 1
  %v104 = vsel %vm103, 0.017343992, %v102
  %vm105 = vcmp.eq.s32.totalorder %v48, 2
  %v106 = vsel %vm105, 0.011874859, %v104
  %vm107 = vcmp.eq.s32.totalorder %v48, 3
  %v108 = vsel %vm107, 0.010126128, %v106
  %vm109 = vcmp.eq.s32.totalorder %v48, 4
  %v110 = vsel %vm109, 0.010511415, %v108
  %vm111 = vcmp.eq.s32.totalorder %v48, 5
  %v112 = vsel %vm111, 0.0119160805, %v110
  %vm113 = vcmp.eq.s32.totalorder %v48, 6
  %v114 = vsel %vm113, 0.010366544, %v112
  %vm115 = vcmp.lt.s32.totalorder %v48, 7
  %v116 = vsel %vm115, 1, 0
  %v117 = vcvt.s32.f32 %v116
  %v118 = vmul.f32 %v114, 10.132588
  %v119 = vsub.f32 %v117, %v118
  %v120 = vld [vmem:[#allocation2] sm:$0x1]
  %v121 = vsub.f32 %v65, %v79
  %v122 = vmul.f32 %v119, %v121
  %v123 = vmul.f32 %v65, 10.132588
  %v124 = vsub.f32 %v123, %v100
  %v125 = vmul.f32 %v114, %v124
  %v126 = vadd.f32 %v122, %v125
  %v127 = vadd.f32 %v120, %v126
  %128 = vst [vmem:[#allocation2] sm:$0x1] %v127
  // Predicated region
  $region14: #{lsr2_loss.1} parent=0 // pred_check
    %p129 = pneg %p42
  $region15: #{lsr2_loss.1} parent=0 // pred_check_branch
    %131 = sbr.rel (%p129) target = $region17
  $region16: #{lsr2_loss.1} parent=0 // pred_region
    %v132 = vld [vmem:[#allocation2] sm:$0x1]
    %vm133 = vcmask 1040384
    %v134 = vsel %vm133, %v132, 0.0
    %135 = vadd.xlane.f32.xlu0 %v134
    %v136 = vpop.xlane.xlu0 %135
    %v137 = vrot.slane %v136, 4
    %v138 = vadd.f32 %v136, %v137
    %v139 = vrot.slane %v138, 2
    %v140 = vadd.f32 %v138, %v139
    %v141 = vrot.slane %v140, 1
    %v142 = vadd.f32 %v140, %v141
    %s143 = vtos %v142
    %v144 = vstv %s143
    %145 = vst [vmem:[%s2] sm:$0x1] %v144
  $region17: #{lsr2_loss.1} parent=0 // pred_fallthru
    _
  // Predicated region
  $region18: #{lsr2_loss.1} parent=0 // pred_check
    _
  $region19: #{lsr2_loss.1} parent=0 // pred_check_branch
    %147 = sbr.rel (0) target = $region21
  $region20: #{lsr2_loss.1} parent=0 // pred_region
    _
  $region21: #{lsr2_loss.1} parent=0 // pred_fallthru
    _
  // Predicated region
  $region22: #{lsr2_loss.1} parent=0 // pred_check
    _
  $region23: #{lsr2_loss.1} parent=0 // pred_check_branch
    %149 = sbr.rel (0) target = $region25
  $region24: #{lsr2_loss.1} parent=0 // pred_region
    _
  $region25: #{lsr2_loss.1} parent=0 // pred_fallthru
    _

</llo_original>
